<compile_context>
chip_gen: v7x
topology: tpu7x:2x2x1
jax: 0.10.0
libtpu: 0.0.40
codegen_flags: <defaults>
</compile_context>

<pallas_src>
import functools

import jax
import jax.numpy as jnp
from jax.experimental import pallas as pl
from jax.experimental.pallas import tpu as pltpu


def _round_up(x, m):
    return ((x + m - 1) // m) * m


def _projector_kernel(x_ref, w1_ref, b1_ref, w2_ref, b2_ref, o_ref, h_ref):
    # x_ref:  (TM, K)  bf16 (or compute dtype)
    # w1_ref: (K, N)   bf16   (transposed from PyTorch (N, K))
    # b1_ref: (1, N)   f32
    # w2_ref: (N, N)   bf16   (transposed)
    # b2_ref: (1, N)   f32
    # o_ref:  (TM, N)  output dtype
    # h_ref:  (TM, N)  VMEM scratch, compute dtype
    h = jnp.dot(x_ref[...], w1_ref[...], preferred_element_type=jnp.float32)
    h = jnp.maximum(h + b1_ref[...], 0.0)            # bias + ReLU in f32
    h_ref[...] = h.astype(h_ref.dtype)               # stage hidden in VMEM
    y = jnp.dot(h_ref[...], w2_ref[...], preferred_element_type=jnp.float32)
    o_ref[...] = (y + b2_ref[...]).astype(o_ref.dtype)


@functools.partial(
    jax.jit, static_argnames=("downsample_rate", "row_tile", "compute_dtype"))
def encoder_projector(x, w1, b1, w2, b2, *, downsample_rate=8, row_tile=256,
                      compute_dtype=jnp.bfloat16):
    """x: (B, T, encoder_dim); w1: (llm_dim, encoder_dim*r); w2: (llm_dim, llm_dim)."""
    B, T, D = x.shape
    r = downsample_rate
    n_discard = T % r
    if n_discard > 0:
        x = x[:, : T - n_discard, :]
    Tp = x.shape[1] // r
    K = D * r
    N = w1.shape[0]
    M = B * Tp

    if M == 0:
        return jnp.zeros((B, 0, N), dtype=x.dtype)

    # Row tile: multiple of 8 (sublane), capped at row_tile; pad M up to it.
    TM = row_tile if M >= row_tile else _round_up(M, 8)
    M_pad = _round_up(M, TM)

    x2d = x.reshape(M, K)
    if M_pad != M:
        x2d = jnp.pad(x2d, ((0, M_pad - M), (0, 0)))

    cdt = jnp.dtype(compute_dtype)
    x2d = x2d.astype(cdt)
    w1_t = w1.T.astype(cdt)                 # (K, N)
    w2_t = w2.T.astype(cdt)                 # (N, N)
    b1_2d = b1.reshape(1, N).astype(jnp.float32)
    b2_2d = b2.reshape(1, N).astype(jnp.float32)

    out_dt = x.dtype
    grid = (M_pad // TM,)

    # VMEM budget: double-buffered x/out tiles + resident weights + h scratch.
    vmem_need = (
        2 * TM * K * cdt.itemsize
        + 2 * TM * N * jnp.dtype(out_dt).itemsize
        + (K * N + N * N) * cdt.itemsize
        + TM * N * cdt.itemsize
        + 2 * 2 * N * 4
    )
    vmem_limit = min(max(int(vmem_need * 1.2) + (2 << 20), 16 << 20), 64 << 20)

    cost = pl.CostEstimate(
        flops=2 * M_pad * (K * N + N * N),
        transcendentals=0,
        bytes_accessed=(x2d.size * cdt.itemsize
                        + (K * N + N * N) * cdt.itemsize
                        + M_pad * N * jnp.dtype(out_dt).itemsize
                        + 2 * N * 4),
    )

    out2d = pl.pallas_call(
        _projector_kernel,
        out_shape=jax.ShapeDtypeStruct((M_pad, N), out_dt),
        grid_spec=pltpu.PrefetchScalarGridSpec(
            num_scalar_prefetch=0,
            grid=grid,
            in_specs=[
                pl.BlockSpec((TM, K), lambda i: (i, 0)),   # x tile (pipelined)
                pl.BlockSpec((K, N), lambda i: (0, 0)),    # W1 resident
                pl.BlockSpec((1, N), lambda i: (0, 0)),    # b1 resident
                pl.BlockSpec((N, N), lambda i: (0, 0)),    # W2 resident
                pl.BlockSpec((1, N), lambda i: (0, 0)),    # b2 resident
            ],
            out_specs=pl.BlockSpec((TM, N), lambda i: (i, 0)),
            scratch_shapes=[pltpu.VMEM((TM, N), cdt)],
        ),
        compiler_params=pltpu.CompilerParams(
            dimension_semantics=("parallel",),
            vmem_limit_bytes=vmem_limit,
        ),
        cost_estimate=cost,
    )(x2d, w1_t, b1_2d, w2_t, b2_2d)

    if M_pad != M:
        out2d = out2d[:M]
    return out2d.reshape(B, Tp, N)


def _reference(x, w1, b1, w2, b2, r=8):
    B, T, D = x.shape
    nd = T % r
    if nd > 0:
        x = x[:, : T - nd, :]
    Tp = x.shape[1] // r
    h = x.reshape(B, Tp, D * r) @ w1.T + b1
    h = jnp.maximum(h, 0.0)
    return h @ w2.T + b2


if __name__ == "__main__":
    # Small shapes consistent with the module's forward:
    #   encoder_dim=32, llm_dim=64, downsample_rate=8, batch=2, seq=17
    B, T, ENC_DIM, LLM_DIM, R = 2, 17, 32, 64, 8

    key = jax.random.PRNGKey(0)
    kx, k1, k2, k3, k4 = jax.random.split(key, 5)

    x = jax.random.normal(kx, (B, T, ENC_DIM), dtype=jnp.float32)
    # nn.Linear(encoder_dim * r, llm_dim): weight (llm_dim, encoder_dim*r), bias (llm_dim,)
    w1 = jax.random.normal(k1, (LLM_DIM, ENC_DIM * R), dtype=jnp.float32) * 0.02
    b1 = jax.random.normal(k2, (LLM_DIM,), dtype=jnp.float32) * 0.02
    # nn.Linear(llm_dim, llm_dim)
    w2 = jax.random.normal(k3, (LLM_DIM, LLM_DIM), dtype=jnp.float32) * 0.02
    b2 = jax.random.normal(k4, (LLM_DIM,), dtype=jnp.float32) * 0.02

    out = encoder_projector(x, w1, b1, w2, b2, downsample_rate=R)
    out = jax.block_until_ready(out)

    ref = _reference(x, w1, b1, w2, b2, r=R)
    assert out.shape == (B, T // R, LLM_DIM), out.shape
    # bf16 matmuls vs f32 reference -> loosened tolerance.
    assert jnp.allclose(out, ref, atol=1e-2, rtol=1e-2), "mismatch vs reference"

    print("KERNEL_OK")
</pallas_src>

<mosaic_0001>
module attributes {stable_mosaic.version = 11 : i64} {
  func.func @_projector_kernel(%arg0: i32, %arg1: memref<8x256xbf16, #tpu.memory_space<vmem>>, %arg2: memref<256x64xbf16, #tpu.memory_space<vmem>>, %arg3: memref<1x64xf32, #tpu.memory_space<vmem>>, %arg4: memref<64x64xbf16, #tpu.memory_space<vmem>>, %arg5: memref<1x64xf32, #tpu.memory_space<vmem>>, %arg6: memref<8x64xf32, #tpu.memory_space<vmem>>, %arg7: memref<8x64xbf16, #tpu.memory_space<vmem>>) attributes {dimension_semantics = [#tpu.dimension_semantics<parallel>], iteration_bounds = array<i64: 1>, scalar_prefetch = 0 : i64, scratch_operands = 1 : i64, tpu.core_type = #tpu.core_type<tc>, window_params = [{transform_indices = @transform_0, window_bounds = array<i64: 8, 256>}, {pipeline_mode = #tpu.pipeline_mode<synchronous>, transform_indices = @transform_1, window_bounds = array<i64: 256, 64>}, {pipeline_mode = #tpu.pipeline_mode<synchronous>, transform_indices = @transform_2, window_bounds = array<i64: 1, 64>}, {pipeline_mode = #tpu.pipeline_mode<synchronous>, transform_indices = @transform_3, window_bounds = array<i64: 64, 64>}, {pipeline_mode = #tpu.pipeline_mode<synchronous>, transform_indices = @transform_4, window_bounds = array<i64: 1, 64>}, {transform_indices = @transform_5, window_bounds = array<i64: 8, 64>}]} {
    %c0 = arith.constant 0 : index
    %c0_0 = arith.constant 0 : index
    %0 = vector.load %arg1[%c0, %c0_0] : memref<8x256xbf16, #tpu.memory_space<vmem>>, vector<8x256xbf16>
    %c0_1 = arith.constant 0 : index
    %c0_2 = arith.constant 0 : index
    %1 = vector.load %arg2[%c0_1, %c0_2] : memref<256x64xbf16, #tpu.memory_space<vmem>>, vector<256x64xbf16>
    %cst = arith.constant dense<0.000000e+00> : vector<8x64xf32>
    %2 = tpu.matmul %0, %1, %cst {dimension_numbers = #tpu.dot_dimension_numbers<[1], [0], [0], [1], [0, 0, 1, 1], [], []>} : vector<8x256xbf16>, vector<256x64xbf16>, vector<8x64xf32> -> vector<8x64xf32>
    %c0_3 = arith.constant 0 : index
    %c0_4 = arith.constant 0 : index
    %3 = vector.load %arg3[%c0_3, %c0_4] : memref<1x64xf32, #tpu.memory_space<vmem>>, vector<1x64xf32>
    %4 = vector.broadcast %3 : vector<1x64xf32> to vector<8x64xf32>
    %5 = arith.addf %2, %4 : vector<8x64xf32>
    %cst_5 = arith.constant 0.000000e+00 : f32
    %6 = vector.broadcast %cst_5 : f32 to vector<8x64xf32>
    %7 = arith.maximumf %5, %6 : vector<8x64xf32>
    %8 = arith.truncf %7 : vector<8x64xf32> to vector<8x64xbf16>
    %c0_6 = arith.constant 0 : index
    %c0_7 = arith.constant 0 : index
    %9 = vector.load %arg7[%c0_6, %c0_7] : memref<8x64xbf16, #tpu.memory_space<vmem>>, vector<8x64xbf16>
    tpu.vector_store %arg7[%c0_6, %c0_7], %8 {strides = array<i32>} : memref<8x64xbf16, #tpu.memory_space<vmem>>, vector<8x64xbf16>,
    %c0_8 = arith.constant 0 : index
    %c0_9 = arith.constant 0 : index
    %10 = vector.load %arg7[%c0_8, %c0_9] : memref<8x64xbf16, #tpu.memory_space<vmem>>, vector<8x64xbf16>
    %c0_10 = arith.constant 0 : index
    %c0_11 = arith.constant 0 : index
    %11 = vector.load %arg4[%c0_10, %c0_11] : memref<64x64xbf16, #tpu.memory_space<vmem>>, vector<64x64xbf16>
    %cst_12 = arith.constant dense<0.000000e+00> : vector<8x64xf32>
    %12 = tpu.matmul %10, %11, %cst_12 {dimension_numbers = #tpu.dot_dimension_numbers<[1], [0], [0], [1], [0, 0, 1, 1], [], []>} : vector<8x64xbf16>, vector<64x64xbf16>, vector<8x64xf32> -> vector<8x64xf32>
    %c0_13 = arith.constant 0 : index
    %c0_14 = arith.constant 0 : index
    %13 = vector.load %arg5[%c0_13, %c0_14] : memref<1x64xf32, #tpu.memory_space<vmem>>, vector<1x64xf32>
    %14 = vector.broadcast %13 : vector<1x64xf32> to vector<8x64xf32>
    %15 = arith.addf %12, %14 : vector<8x64xf32>
    %c0_15 = arith.constant 0 : index
    %c0_16 = arith.constant 0 : index
    %16 = vector.load %arg6[%c0_15, %c0_16] : memref<8x64xf32, #tpu.memory_space<vmem>>, vector<8x64xf32>
    tpu.vector_store %arg6[%c0_15, %c0_16], %15 {strides = array<i32>} : memref<8x64xf32, #tpu.memory_space<vmem>>, vector<8x64xf32>,
    return
  }
  func.func @transform_0(%arg0: i32) -> (i32, i32) {
    %c0_i32 = arith.constant 0 : i32
    %c0_i32_0 = arith.constant 0 : i32
    return %arg0, %c0_i32 : i32, i32
  }
  func.func @transform_1(%arg0: i32) -> (i32, i32) {
    %c0_i32 = arith.constant 0 : i32
    %c0_i32_0 = arith.constant 0 : i32
    %c0_i32_1 = arith.constant 0 : i32
    return %c0_i32, %c0_i32_0 : i32, i32
  }
  func.func @transform_2(%arg0: i32) -> (i32, i32) {
    %c0_i32 = arith.constant 0 : i32
    %c0_i32_0 = arith.constant 0 : i32
    %c0_i32_1 = arith.constant 0 : i32
    return %c0_i32, %c0_i32_0 : i32, i32
  }
  func.func @transform_3(%arg0: i32) -> (i32, i32) {
    %c0_i32 = arith.constant 0 : i32
    %c0_i32_0 = arith.constant 0 : i32
    %c0_i32_1 = arith.constant 0 : i32
    return %c0_i32, %c0_i32_0 : i32, i32
  }
  func.func @transform_4(%arg0: i32) -> (i32, i32) {
    %c0_i32 = arith.constant 0 : i32
    %c0_i32_0 = arith.constant 0 : i32
    %c0_i32_1 = arith.constant 0 : i32
    return %c0_i32, %c0_i32_0 : i32, i32
  }
  func.func @transform_5(%arg0: i32) -> (i32, i32) {
    %c0_i32 = arith.constant 0 : i32
    %c0_i32_0 = arith.constant 0 : i32
    return %arg0, %c0_i32 : i32, i32
  }
}

</mosaic_0001>

<llo_original>
// kernel: encoder_projector.1
$region0: #{encoder_projector.1}
  #allocation0 [shape = 'u32[]', space=smem, size = 0x4, offset = 0x4, fixed_abs, tag = 'smem constant byte address 0x4 - core index']
  #allocation1 [shape = 'u32[144,128]{1,0:T(1,128)}', space=vmem, size = 0x12000, scoped, tag = 'internal scratch']
  #allocation2 [shape = 'bf16[8,64]{1,0:T(8,128)(2,1)}', space=vmem, size = 0x800, scoped, tag = 'scratch operand']
  %s0 = inlined_call_operand.vmem [shape: bf16[8,256], index: 0, kind: input, shape index: {}]
  %s1 = inlined_call_operand.vmem [shape: bf16[256,64], index: 1, kind: input, shape index: {}]
  %s2 = inlined_call_operand.vmem [shape: f32[1,64], index: 2, kind: input, shape index: {}]
  %s3 = inlined_call_operand.vmem [shape: bf16[64,64], index: 3, kind: input, shape index: {}]
  %s4 = inlined_call_operand.vmem [shape: f32[1,64], index: 4, kind: input, shape index: {}]
  %s5 = inlined_call_operand.vmem [shape: f32[8,64], index: 5, kind: output, shape index: {}]
  %s6 = sld [smem:[#allocation0]]
  $region30: #{encoder_projector.1} parent=0
    _
  %s8 = ssub.s32 1, %s6
  %s9 = scalar_select 0, %s8, %s6
  // Predicated region
  $region2: #{encoder_projector.1} parent=0 // pred_check
    _
  $region3: #{encoder_projector.1} parent=0 // pred_check_branch
    %11 = sbr.rel (0) target = $region5
  $region4: #{encoder_projector.1} parent=0 // pred_region
    _
  $region5: #{encoder_projector.1} parent=0 // pred_fallthru
    _
  // Predicated region
  $region6: #{encoder_projector.1} parent=0 // pred_check
    _
  $region7: #{encoder_projector.1} parent=0 // pred_check_branch
    %13 = sbr.rel (0) target = $region9
  $region8: #{encoder_projector.1} parent=0 // pred_region
    _
  $region9: #{encoder_projector.1} parent=0 // pred_fallthru
    _
  // Predicated region
  $region10: #{encoder_projector.1} parent=0 // pred_check
    _
  $region11: #{encoder_projector.1} parent=0 // pred_check_branch
    %15 = sbr.rel (0) target = $region13
  $region12: #{encoder_projector.1} parent=0 // pred_region
    _
  $region13: #{encoder_projector.1} parent=0 // pred_fallthru
    _
  // Predicated region
  $region14: #{encoder_projector.1} parent=0 // pred_check
    _
  $region15: #{encoder_projector.1} parent=0 // pred_check_branch
    %17 = sbr.rel (0) target = $region17
  $region16: #{encoder_projector.1} parent=0 // pred_region
    _
  $region17: #{encoder_projector.1} parent=0 // pred_fallthru
    _
  // Predicated region
  $region18: #{encoder_projector.1} parent=0 // pred_check
    _
  $region19: #{encoder_projector.1} parent=0 // pred_check_branch
    %19 = sbr.rel (0) target = $region21
  $region20: #{encoder_projector.1} parent=0 // pred_region
    _
  $region21: #{encoder_projector.1} parent=0 // pred_fallthru
    _
  %v21 = vld [vmem:[%s0] sm:$0xff]
  %v22 = vld [vmem:[%s1] sm:$0xf]
  %v23 = vld [vmem:[%s1 + $0x4] sm:$0xf]
  %v24 = vld [vmem:[%s1 + $0x8] sm:$0xf]
  %v25 = vld [vmem:[%s1 + $0xc] sm:$0xf]
  %v26 = vld [vmem:[%s1 + $0x10] sm:$0xf]
  %v27 = vld [vmem:[%s1 + $0x14] sm:$0xf]
  %v28 = vld [vmem:[%s1 + $0x18] sm:$0xf]
  %v29 = vld [vmem:[%s1 + $0x1c] sm:$0xf]
  %v30 = vld [vmem:[%s1 + $0x20] sm:$0xf]
  %v31 = vld [vmem:[%s1 + $0x24] sm:$0xf]
  %v32 = vld [vmem:[%s1 + $0x28] sm:$0xf]
  %v33 = vld [vmem:[%s1 + $0x2c] sm:$0xf]
  %v34 = vld [vmem:[%s1 + $0x30] sm:$0xf]
  %v35 = vld [vmem:[%s1 + $0x34] sm:$0xf]
  %v36 = vld [vmem:[%s1 + $0x38] sm:$0xf]
  %v37 = vld [vmem:[%s1 + $0x3c] sm:$0xf]
  %v38 = vld [vmem:[%s1 + $0x40] sm:$0xf]
  %v39 = vld [vmem:[%s1 + $0x44] sm:$0xf]
  %v40 = vld [vmem:[%s1 + $0x48] sm:$0xf]
  %v41 = vld [vmem:[%s1 + $0x4c] sm:$0xf]
  %v42 = vld [vmem:[%s1 + $0x50] sm:$0xf]
  %v43 = vld [vmem:[%s1 + $0x54] sm:$0xf]
  %v44 = vld [vmem:[%s1 + $0x58] sm:$0xf]
  %v45 = vld [vmem:[%s1 + $0x5c] sm:$0xf]
  %v46 = vld [vmem:[%s1 + $0x60] sm:$0xf]
  %v47 = vld [vmem:[%s1 + $0x64] sm:$0xf]
  %v48 = vld [vmem:[%s1 + $0x68] sm:$0xf]
  %v49 = vld [vmem:[%s1 + $0x6c] sm:$0xf]
  %v50 = vld [vmem:[%s1 + $0x70] sm:$0xf]
  %v51 = vld [vmem:[%s1 + $0x74] sm:$0xf]
  %v52 = vld [vmem:[%s1 + $0x78] sm:$0xf]
  %v53 = vld [vmem:[%s1 + $0x7c] sm:$0xf]
  %v54 = vld [vmem:[%s2] sm:$0x1]
  %v56 = vlaneseq
  %v57 = vshrl.u32 %v56, 7
  %v58 = vsub.s32 0, %v57
  %v59 = vrot.slane %v54, %v58
  %v62 = vunpack.c.l.b16 %v21
  %v63 = vunpack.c.h.b16 %v21
  %v64 = vpack.c.b16 %v62, %v62
  %v65 = vpack.c.b16 %v63, %v63
  %v100 = vunpack.c.l.b16 %v22
  %v101 = vunpack.c.l.b16 %v23
  %v102 = vunpack.c.l.b16 %v24
  %v103 = vunpack.c.l.b16 %v25
  %v104 = vunpack.c.l.b16 %v26
  %v105 = vunpack.c.l.b16 %v27
  %v106 = vunpack.c.l.b16 %v28
  %v107 = vunpack.c.l.b16 %v29
  %v108 = vunpack.c.l.b16 %v30
  %v109 = vunpack.c.l.b16 %v31
  %v110 = vunpack.c.l.b16 %v32
  %v111 = vunpack.c.l.b16 %v33
  %v112 = vunpack.c.l.b16 %v34
  %v113 = vunpack.c.l.b16 %v35
  %v114 = vunpack.c.l.b16 %v36
  %v115 = vunpack.c.l.b16 %v37
  %v116 = vunpack.c.l.b16 %v38
  %v117 = vunpack.c.l.b16 %v39
  %v118 = vunpack.c.l.b16 %v40
  %v119 = vunpack.c.l.b16 %v41
  %v120 = vunpack.c.l.b16 %v42
  %v121 = vunpack.c.l.b16 %v43
  %v122 = vunpack.c.l.b16 %v44
  %v123 = vunpack.c.l.b16 %v45
  %v124 = vunpack.c.l.b16 %v46
  %v125 = vunpack.c.l.b16 %v47
  %v126 = vunpack.c.l.b16 %v48
  %v127 = vunpack.c.l.b16 %v49
  %v128 = vunpack.c.l.b16 %v50
  %v129 = vunpack.c.l.b16 %v51
  %v130 = vunpack.c.l.b16 %v52
  %v131 = vunpack.c.l.b16 %v53
  %v132 = vpack.c.b16 %v101, %v100
  %v133 = vpack.c.b16 %v103, %v102
  %v134 = vpack.c.b16 %v105, %v104
  %v135 = vpack.c.b16 %v107, %v106
  %v136 = vpack.c.b16 %v109, %v108
  %v137 = vpack.c.b16 %v111, %v110
  %v138 = vpack.c.b16 %v113, %v112
  %v139 = vpack.c.b16 %v115, %v114
  %v140 = vpack.c.b16 %v117, %v116
  %v141 = vpack.c.b16 %v119, %v118
  %v142 = vpack.c.b16 %v121, %v120
  %v143 = vpack.c.b16 %v123, %v122
  %v144 = vpack.c.b16 %v125, %v124
  %v145 = vpack.c.b16 %v127, %v126
  %v146 = vpack.c.b16 %v129, %v128
  %v147 = vpack.c.b16 %v131, %v130
  %164 = vmatprep.subr.bf16.mxu0 0
  %165 = vmatpush1.bf16.msra.mxu0 %v132
  %166 = vmatprep.subr.bf16.mxu0 0
  %167 = vmatpush1.bf16.msra.mxu0 %v133
  %168 = vmatprep.subr.bf16.mxu0 0
  %169 = vmatpush1.bf16.msra.mxu0 %v134
  %170 = vmatprep.subr.bf16.mxu0 0
  %171 = vmatpush1.bf16.msra.mxu0 %v135
  %172 = vmatprep.subr.bf16.mxu0 0
  %173 = vmatpush1.bf16.msra.mxu0 %v136
  %174 = vmatprep.subr.bf16.mxu0 0
  %175 = vmatpush1.bf16.msra.mxu0 %v137
  %176 = vmatprep.subr.bf16.mxu0 0
  %177 = vmatpush1.bf16.msra.mxu0 %v138
  %178 = vmatprep.subr.bf16.mxu0 0
  %179 = vmatpush1.bf16.msra.mxu0 %v139
  %180 = vmatprep.subr.bf16.mxu0 0
  %181 = vmatpush1.bf16.msra.mxu0 %v140
  %182 = vmatprep.subr.bf16.mxu0 0
  %183 = vmatpush1.bf16.msra.mxu0 %v141
  %184 = vmatprep.subr.bf16.mxu0 0
  %185 = vmatpush1.bf16.msra.mxu0 %v142
  %186 = vmatprep.subr.bf16.mxu0 0
  %187 = vmatpush1.bf16.msra.mxu0 %v143
  %188 = vmatprep.subr.bf16.mxu0 0
  %189 = vmatpush1.bf16.msra.mxu0 %v144
  %190 = vmatprep.subr.bf16.mxu0 0
  %191 = vmatpush1.bf16.msra.mxu0 %v145
  %192 = vmatprep.subr.bf16.mxu0 0
  %193 = vmatpush1.bf16.msra.mxu0 %v146
  %194 = vmatprep.subr.bf16.mxu0 0
  %195 = vmatpush1.bf16.msra.mxu0 %v147
  %196 = vmatprep.mubr.bf16.mxu0 %v65
  %197 = vmatmul.mubr.bf16.gmra.mrb[0].mxu0 %v64
  %v198 = vpop.f32.mrb[0].mxu0
  %v199 = vadd.f32 %v59, %v198
  %v200 = vpop.f32.mrb[0].mxu0
  %v201 = vpop.f32.mrb[0].mxu0
  %v202 = vpop.f32.mrb[0].mxu0
  %203 = vdwg.mxu0
  %v204 = vmax.f32 %v199, 0.0
  %v205 = vpack.c.bf16 %v204, %v204
  %vm206 = vcmask 519168
  %207 = vst.msk [vmem:[#allocation2] sm:$0xf] %vm206, %v205
  %v208 = vld [vmem:[#allocation2] sm:$0xf]
  %v209 = vld [vmem:[%s3] sm:$0xf]
  %v210 = vld [vmem:[%s3 + $0x4] sm:$0xf]
  %v211 = vld [vmem:[%s3 + $0x8] sm:$0xf]
  %v212 = vld [vmem:[%s3 + $0xc] sm:$0xf]
  %v213 = vld [vmem:[%s3 + $0x10] sm:$0xf]
  %v214 = vld [vmem:[%s3 + $0x14] sm:$0xf]
  %v215 = vld [vmem:[%s3 + $0x18] sm:$0xf]
  %v216 = vld [vmem:[%s3 + $0x1c] sm:$0xf]
  %v217 = vld [vmem:[%s4] sm:$0x1]
  %v219 = vlaneseq
  %v220 = vshrl.u32 %v219, 7
  %v221 = vsub.s32 0, %v220
  %v222 = vrot.slane %v217, %v221
  %v232 = vunpack.c.l.b16 %v209
  %v233 = vunpack.c.l.b16 %v210
  %v234 = vunpack.c.l.b16 %v211
  %v235 = vunpack.c.l.b16 %v212
  %v236 = vunpack.c.l.b16 %v213
  %v237 = vunpack.c.l.b16 %v214
  %v238 = vunpack.c.l.b16 %v215
  %v239 = vunpack.c.l.b16 %v216
  %v240 = vpack.c.b16 %v233, %v232
  %v241 = vpack.c.b16 %v235, %v234
  %v242 = vpack.c.b16 %v237, %v236
  %v243 = vpack.c.b16 %v239, %v238
  %vm248 = vcmask 523264
  %v250 = vsel %vm248, %v208, 0
  %252 = vmatprep.subr.bf16.mxu0 0
  %253 = vmatpush1.bf16.msra.mxu0 %v240
  %254 = vmatprep.subr.bf16.mxu0 0
  %255 = vmatpush1.bf16.msra.mxu0 %v241
  %256 = vmatprep.subr.bf16.mxu0 0
  %257 = vmatpush1.bf16.msra.mxu0 %v242
  %258 = vmatprep.subr.bf16.mxu0 0
  %259 = vmatpush1.bf16.msra.mxu0 %v243
  %260 = vmatprep.subr.bf16.mxu0 0
  %261 = vmatpush1.bf16.msra.mxu0 0
  %262 = vmatprep.subr.bf16.mxu0 0
  %263 = vmatpush1.bf16.msra.mxu0 0
  %264 = vmatprep.subr.bf16.mxu0 0
  %265 = vmatpush1.bf16.msra.mxu0 0
  %266 = vmatprep.subr.bf16.mxu0 0
  %267 = vmatpush1.bf16.msra.mxu0 0
  %268 = vmatprep.subr.bf16.mxu0 0
  %269 = vmatpush1.bf16.msra.mxu0 0
  %270 = vmatprep.subr.bf16.mxu0 0
  %271 = vmatpush1.bf16.msra.mxu0 0
  %272 = vmatprep.subr.bf16.mxu0 0
  %273 = vmatpush1.bf16.msra.mxu0 0
  %274 = vmatprep.subr.bf16.mxu0 0
  %275 = vmatpush1.bf16.msra.mxu0 0
  %276 = vmatprep.subr.bf16.mxu0 0
  %277 = vmatpush1.bf16.msra.mxu0 0
  %278 = vmatprep.subr.bf16.mxu0 0
  %279 = vmatpush1.bf16.msra.mxu0 0
  %280 = vmatprep.subr.bf16.mxu0 0
  %281 = vmatpush1.bf16.msra.mxu0 0
  %282 = vmatprep.subr.bf16.mxu0 0
  %283 = vmatpush1.bf16.msra.mxu0 0
  %284 = vmatprep.mubr.bf16.mxu0 0
  %285 = vmatmul.mubr.bf16.gmra.mrb[0].mxu0 %v250
  %v286 = vpop.f32.mrb[0].mxu0
  %v287 = vadd.f32 %v222, %v286
  %v288 = vpop.f32.mrb[0].mxu0
  %v289 = vpop.f32.mrb[0].mxu0
  %v290 = vpop.f32.mrb[0].mxu0
  %291 = vdwg.mxu0
  %292 = vst.msk [vmem:[%s5] sm:$0xff] %vm248, %v287
  // Predicated region
  $region22: #{encoder_projector.1} parent=0 // pred_check
    _
  $region23: #{encoder_projector.1} parent=0 // pred_check_branch
    %294 = sbr.rel (0) target = $region25
  $region24: #{encoder_projector.1} parent=0 // pred_region
    _
  $region25: #{encoder_projector.1} parent=0 // pred_fallthru
    _
  // Predicated region
  $region26: #{encoder_projector.1} parent=0 // pred_check
    _
  $region27: #{encoder_projector.1} parent=0 // pred_check_branch
    %296 = sbr.rel (0) target = $region29
  $region28: #{encoder_projector.1} parent=0 // pred_region
    _
  $region29: #{encoder_projector.1} parent=0 // pred_fallthru
    _

</llo_original>
